<compile_context>
chip_gen: v7x
topology: tpu7x:2x2x1
jax: 0.10.0
libtpu: 0.0.40
codegen_flags: <defaults>
</compile_context>

<pallas_src>
import jax
import jax.numpy as jnp
from jax.experimental import pallas as pl
from jax.experimental.pallas import tpu as pltpu


def _bce_sum_kernel(x_ref, y_ref, pw_ref, out_ref):
    """Unscaled sum of BCE-with-logits terms for one [block_rows, 128] tile.

    Writes an [8, 128] vector partial sum (no cross-lane reduce, no scalar RMW).
    """
    x = x_ref[...].astype(jnp.float32)          # [block_rows, 128]
    y = y_ref[...].astype(jnp.float32)          # [block_rows, 128]
    pwm1 = pw_ref[...]                          # [1, 128] or [block_rows, 128]

    # numerically stable softplus(-x) = max(-x, 0) + log1p(exp(-|x|))
    sp = jnp.maximum(-x, 0.0) + jnp.log1p(jnp.exp(-jnp.abs(x)))
    l = (1.0 - y) * x + (1.0 + pwm1 * y) * sp   # per-element BCE (unscaled)

    # Reduce only over full vreg tiles (VPU adds); final reduce is in the wrapper.
    out_ref[...] = jnp.sum(l.reshape(-1, 8, 128), axis=0)


def _f32(x):
    return jnp.asarray(x).astype(jnp.float32)


def combined_loss(outputs, targets, disease_weight=None, class_weights=None,
                  *, tile_rows=4096):
    """Pallas equivalent of CombinedLoss.forward.

    outputs = (disease_risk_out [B,1], disease_labels_out [B,C])
    targets = (disease_risk_targets [B], disease_labels_targets [B,C])
    disease_weight: [1] pos_weight for the binary head (or None)
    class_weights : [C] pos_weight for the multilabel head (or None)
    """
    risk_out, labels_out = outputs
    risk_tgt, labels_tgt = targets
    B, C = labels_out.shape
    N = B * C

    # ---------------- risk head: plain JAX (B elements, ~1/C of the work) ----
    x_r = _f32(risk_out).reshape(B)
    y_r = _f32(risk_tgt).reshape(B)
    pw_r = (jnp.float32(1.0) if disease_weight is None
            else _f32(disease_weight).reshape(()))
    sp_r = jnp.maximum(-x_r, 0.0) + jnp.log1p(jnp.exp(-jnp.abs(x_r)))
    loss_risk = jnp.mean((1.0 - y_r) * x_r + (1.0 + (pw_r - 1.0) * y_r) * sp_r)

    # ---------------- multilabel head: lane-dense Pallas kernel --------------
    rows = -(-N // 128)                               # ceil(N / 128)
    nb = -(-rows // max(int(tile_rows), 8))           # number of grid blocks
    block_rows = ((-(-rows // nb) + 7) // 8) * 8      # sublane-aligned block
    rows_pad = nb * block_rows
    n_pad = rows_pad * 128

    x_flat = labels_out.reshape(N)                    # free row-major reshape
    y_flat = labels_tgt.reshape(N)
    if n_pad != N:
        # Padded elements contribute exactly 0:
        #   x=-1e4, y=0  ->  (1-y)*x + softplus(-x) = -1e4 + 1e4 = 0
        # (exp(-1e4) underflows to 0 in f32), so no in-kernel mask is needed.
        x_flat = jnp.pad(x_flat, (0, n_pad - N), constant_values=-1e4)
        y_flat = jnp.pad(y_flat, (0, n_pad - N), constant_values=0)
    x2 = x_flat.reshape(rows_pad, 128)
    y2 = y_flat.reshape(rows_pad, 128)

    # pos_weight - 1 as a lane pattern.
    if class_weights is None:
        pw_arr = jnp.zeros((1, 128), jnp.float32)
        pw_spec = pl.BlockSpec((1, 128), lambda i: (0, 0))
    elif 128 % C == 0:
        cw_m1 = _f32(class_weights).reshape(C) - 1.0
        pw_arr = jnp.tile(cw_m1, 128 // C).reshape(1, 128)   # lane-resident
        pw_spec = pl.BlockSpec((1, 128), lambda i: (0, 0))
    else:
        # General C: stream a full per-row pattern alongside the inputs.
        cw_m1 = _f32(class_weights).reshape(C) - 1.0
        col = jnp.arange(n_pad, dtype=jnp.int32) % C
        pw_arr = cw_m1[col].reshape(rows_pad, 128)
        pw_spec = pl.BlockSpec((block_rows, 128), lambda i: (i, 0))

    cost = pl.CostEstimate(
        flops=8 * n_pad,
        transcendentals=2 * n_pad,
        bytes_accessed=int((x2.dtype.itemsize + y2.dtype.itemsize) * n_pad
                           + pw_arr.size * 4 + nb * 8 * 128 * 4),
    )

    partials = pl.pallas_call(
        _bce_sum_kernel,
        out_shape=jax.ShapeDtypeStruct((nb * 8, 128), jnp.float32),
        grid=(nb,),
        in_specs=[
            pl.BlockSpec((block_rows, 128), lambda i: (i, 0)),
            pl.BlockSpec((block_rows, 128), lambda i: (i, 0)),
            pw_spec,
        ],
        out_specs=pl.BlockSpec((8, 128), lambda i: (i, 0)),
        compiler_params=pltpu.CompilerParams(
            # Independent per-block partials -> safe to shard across v7x cores.
            dimension_semantics=("parallel",),
            # ~8-12 MiB double-buffered footprint; fits v5e's 16 MiB default
            # scoped VMEM and v7x's 64 MiB physical VMEM with headroom.
            vmem_limit_bytes=32 * 1024 * 1024,
        ),
        cost_estimate=cost,
    )(x2, y2, pw_arr)

    loss_labels = jnp.sum(partials) / (B * C)   # unscaled sum -> mean
    return 0.3 * loss_risk + 0.7 * loss_labels


def _reference_loss(outputs, targets, disease_weight, class_weights):
    """Plain-JAX reference matching torch.nn.BCEWithLogitsLoss semantics."""
    def bce(x, y, pw):
        sp = jnp.maximum(-x, 0.0) + jnp.log1p(jnp.exp(-jnp.abs(x)))
        return jnp.mean((1.0 - y) * x + (1.0 + (pw - 1.0) * y) * sp)
    risk_out, labels_out = outputs
    risk_tgt, labels_tgt = targets
    loss_risk = bce(risk_out, risk_tgt[:, None], disease_weight.reshape(1, 1))
    loss_labels = bce(labels_out, labels_tgt, class_weights.reshape(1, -1))
    return 0.3 * loss_risk + 0.7 * loss_labels


if __name__ == "__main__":
    def make_case(key, B, C):
        k1, k2, k3, k4 = jax.random.split(key, 4)
        risk_out = jax.random.normal(k1, (B, 1), dtype=jnp.float32)
        labels_out = jax.random.normal(k2, (B, C), dtype=jnp.float32)
        risk_tgt = (jax.random.uniform(k3, (B,)) > 0.5).astype(jnp.float32)
        labels_tgt = (jax.random.uniform(k4, (B, C)) > 0.5).astype(jnp.float32)
        return (risk_out, labels_out), (risk_tgt, labels_tgt)

    # Case 1: module demo sizes -> single lane-dense block, resident pos_weight.
    C = 16
    disease_weight = jnp.array([2.0], dtype=jnp.float32)
    class_weights = 1.0 + 0.1 * jnp.arange(C, dtype=jnp.float32)
    outputs, targets = make_case(jax.random.PRNGKey(0), 8, C)
    loss = combined_loss(outputs, targets, disease_weight, class_weights)
    jax.block_until_ready(loss)
    ref = _reference_loss(outputs, targets, disease_weight, class_weights)
    assert jnp.allclose(loss, ref, rtol=1e-4, atol=1e-6), (loss, ref)

    # Case 2: larger batch with a tiny forced tile -> multi-block "parallel" grid.
    outputs2, targets2 = make_case(jax.random.PRNGKey(1), 160, C)
    loss2 = combined_loss(outputs2, targets2, disease_weight, class_weights,
                          tile_rows=8)
    jax.block_until_ready(loss2)
    ref2 = _reference_loss(outputs2, targets2, disease_weight, class_weights)
    assert jnp.allclose(loss2, ref2, rtol=1e-4, atol=1e-6), (loss2, ref2)

    # Case 3: C that does not divide 128 -> streamed per-row pos_weight pattern.
    C3 = 12
    cw3 = 1.0 + 0.05 * jnp.arange(C3, dtype=jnp.float32)
    outputs3, targets3 = make_case(jax.random.PRNGKey(2), 16, C3)
    loss3 = combined_loss(outputs3, targets3, disease_weight, cw3)
    jax.block_until_ready(loss3)
    ref3 = _reference_loss(outputs3, targets3, disease_weight, cw3)
    assert jnp.allclose(loss3, ref3, rtol=1e-4, atol=1e-6), (loss3, ref3)

    print("KERNEL_OK")
</pallas_src>

<mosaic_0001>
module attributes {stable_mosaic.version = 11 : i64} {
  func.func @_bce_sum_kernel(%arg0: i32, %arg1: memref<8x128xf32, #tpu.memory_space<vmem>>, %arg2: memref<8x128xf32, #tpu.memory_space<vmem>>, %arg3: memref<1x128xf32, #tpu.memory_space<vmem>>, %arg4: memref<8x128xf32, #tpu.memory_space<vmem>>) attributes {dimension_semantics = [#tpu.dimension_semantics<parallel>], iteration_bounds = array<i64: 1>, scalar_prefetch = 0 : i64, scratch_operands = 0 : i64, tpu.core_type = #tpu.core_type<tc>, window_params = [{transform_indices = @transform_0, window_bounds = array<i64: 8, 128>}, {transform_indices = @transform_1, window_bounds = array<i64: 8, 128>}, {pipeline_mode = #tpu.pipeline_mode<synchronous>, transform_indices = @transform_2, window_bounds = array<i64: 1, 128>}, {transform_indices = @transform_3, window_bounds = array<i64: 8, 128>}]} {
    %c0 = arith.constant 0 : index
    %c0_0 = arith.constant 0 : index
    %0 = vector.load %arg1[%c0, %c0_0] : memref<8x128xf32, #tpu.memory_space<vmem>>, vector<8x128xf32>
    %c0_1 = arith.constant 0 : index
    %c0_2 = arith.constant 0 : index
    %1 = vector.load %arg2[%c0_1, %c0_2] : memref<8x128xf32, #tpu.memory_space<vmem>>, vector<8x128xf32>
    %c0_3 = arith.constant 0 : index
    %c0_4 = arith.constant 0 : index
    %2 = vector.load %arg3[%c0_3, %c0_4] : memref<1x128xf32, #tpu.memory_space<vmem>>, vector<1x128xf32>
    %cst = arith.constant 0.000000e+00 : f32
    %3 = vector.broadcast %cst : f32 to vector<8x128xf32>
    %4 = arith.subf %3, %0 : vector<8x128xf32>
    %cst_5 = arith.constant 0.000000e+00 : f32
    %5 = vector.broadcast %cst_5 : f32 to vector<8x128xf32>
    %6 = arith.maximumf %4, %5 : vector<8x128xf32>
    %7 = math.absf %0 : vector<8x128xf32>
    %cst_6 = arith.constant 0.000000e+00 : f32
    %8 = vector.broadcast %cst_6 : f32 to vector<8x128xf32>
    %9 = arith.subf %8, %7 : vector<8x128xf32>
    %10 = math.exp %9 : vector<8x128xf32>
    %11 = math.log1p %10 : vector<8x128xf32>
    %12 = arith.addf %6, %11 : vector<8x128xf32>
    %cst_7 = arith.constant 1.000000e+00 : f32
    %13 = vector.broadcast %cst_7 : f32 to vector<8x128xf32>
    %14 = arith.subf %13, %1 : vector<8x128xf32>
    %15 = arith.mulf %14, %0 : vector<8x128xf32>
    %16 = vector.broadcast %2 : vector<1x128xf32> to vector<8x128xf32>
    %17 = arith.mulf %16, %1 : vector<8x128xf32>
    %cst_8 = arith.constant 1.000000e+00 : f32
    %18 = vector.broadcast %cst_8 : f32 to vector<8x128xf32>
    %19 = arith.addf %18, %17 : vector<8x128xf32>
    %20 = arith.mulf %19, %12 : vector<8x128xf32>
    %21 = arith.addf %15, %20 : vector<8x128xf32>
    %22 = vector.shape_cast %21 : vector<8x128xf32> to vector<1x8x128xf32>
    %cst_9 = arith.constant dense<0.000000e+00> : vector<8x128xf32>
    %23 = vector.multi_reduction <add>, %22, %cst_9 [0] : vector<1x8x128xf32> to vector<8x128xf32>
    %c0_10 = arith.constant 0 : index
    %c0_11 = arith.constant 0 : index
    %24 = vector.load %arg4[%c0_10, %c0_11] : memref<8x128xf32, #tpu.memory_space<vmem>>, vector<8x128xf32>
    tpu.vector_store %arg4[%c0_10, %c0_11], %23 {strides = array<i32>} : memref<8x128xf32, #tpu.memory_space<vmem>>, vector<8x128xf32>,
    return
  }
  func.func @transform_0(%arg0: i32) -> (i32, i32) {
    %c0_i32 = arith.constant 0 : i32
    %c0_i32_0 = arith.constant 0 : i32
    return %arg0, %c0_i32 : i32, i32
  }
  func.func @transform_1(%arg0: i32) -> (i32, i32) {
    %c0_i32 = arith.constant 0 : i32
    %c0_i32_0 = arith.constant 0 : i32
    return %arg0, %c0_i32 : i32, i32
  }
  func.func @transform_2(%arg0: i32) -> (i32, i32) {
    %c0_i32 = arith.constant 0 : i32
    %c0_i32_0 = arith.constant 0 : i32
    %c0_i32_1 = arith.constant 0 : i32
    return %c0_i32, %c0_i32_0 : i32, i32
  }
  func.func @transform_3(%arg0: i32) -> (i32, i32) {
    %c0_i32 = arith.constant 0 : i32
    %c0_i32_0 = arith.constant 0 : i32
    return %arg0, %c0_i32 : i32, i32
  }
}

</mosaic_0001>

<llo_original>
// kernel: tpu_custom_call.1
$region0: #{tpu_custom_call.1}
  #allocation0 [shape = 'u32[]', space=smem, size = 0x4, offset = 0x4, fixed_abs, tag = 'smem constant byte address 0x4 - core index']
  #allocation1 [shape = 'u32[144,128]{1,0:T(1,128)}', space=vmem, size = 0x12000, scoped, tag = 'internal scratch']
  %s0 = inlined_call_operand.hbm [shape: f32[8,128], index: 0, kind: input, shape index: {}]
  %s1 = inlined_call_operand.hbm [shape: f32[8,128], index: 1, kind: input, shape index: {}]
  %s2 = inlined_call_operand.vmem [shape: f32[1,128], index: 2, kind: input, shape index: {}]
  %s3 = inlined_call_operand.hbm [shape: f32[8,128], index: 3, kind: output, shape index: {}]
  %s4 = sld [smem:[#allocation0]]
  $region30: #{tpu_custom_call.1} parent=0
    _
  %s6 = ssub.s32 1, %s4
  %s7 = scalar_select 0, %s6, %s4
  $region1: #{tpu_custom_call.1} parent=0
    #allocation2 [shape = 'u8[4096]{0}', space=vmem, size = 0x1000, scoped, tag = 'input window, operand 0, single buffered']
    #allocation3 [shape = 's32[1]{0}', space=sflag, size = 0x4, scoped, tag = 'scoped memory for tpu_custom_call.1']
    #allocation4 [shape = 's32[1]{0}', space=sflag, size = 0x4, scoped, tag = 'scoped memory for tpu_custom_call.1']
    #allocation5 [shape = 'u8[4096]{0}', space=vmem, size = 0x1000, scoped, tag = 'input window, operand 1, single buffered']
    #allocation6 [shape = 's32[1]{0}', space=sflag, size = 0x4, scoped, tag = 'scoped memory for tpu_custom_call.1']
    #allocation7 [shape = 'u8[4096]{0}', space=vmem, size = 0x1000, scoped, tag = 'output window, operand 0, single buffered']
    %8 = vsyncpa [#allocation3], 0
    %9 = vsyncpa [#allocation6], 0
    %10 = vsyncpa [#allocation4], 0
    // Predicated region
    $region2: #{tpu_custom_call.1} parent=1 // pred_check
      _
    $region3: #{tpu_custom_call.1} parent=1 // pred_check_branch
      %12 = sbr.rel (0) target = $region5
    $region4: #{tpu_custom_call.1} parent=1 // pred_region
      %s14 = ssub.s32 128, 128
      %15 = vsyncadd [#allocation3], %s14
      %s17 = sshll.u32 [#allocation2], 4
      %s18 = int_to_ptr.vmem [resolvable:$true] %s17
      %20 = dma.hbm_to_vmem [thread:$0]  %s0, 128, %s18, [#allocation3]
    $region5: #{tpu_custom_call.1} parent=1 // pred_fallthru
      _
    // Predicated region
    $region6: #{tpu_custom_call.1} parent=1 // pred_check
      _
    $region7: #{tpu_custom_call.1} parent=1 // pred_check_branch
      %22 = sbr.rel (0) target = $region9
    $region8: #{tpu_custom_call.1} parent=1 // pred_region
      %s24 = ssub.s32 128, 128
      %25 = vsyncadd [#allocation6], %s24
      %s27 = sshll.u32 [#allocation5], 4
      %s28 = int_to_ptr.vmem [resolvable:$true] %s27
      %30 = dma.hbm_to_vmem [thread:$0]  %s1, 128, %s28, [#allocation6]
    $region9: #{tpu_custom_call.1} parent=1 // pred_fallthru
      _
    // Predicated region
    $region10: #{tpu_custom_call.1} parent=1 // pred_check
      _
    $region11: #{tpu_custom_call.1} parent=1 // pred_check_branch
      %32 = sbr.rel (0) target = $region13
    $region12: #{tpu_custom_call.1} parent=1 // pred_region
      _
    $region13: #{tpu_custom_call.1} parent=1 // pred_fallthru
      _
    // Predicated region
    $region14: #{tpu_custom_call.1} parent=1 // pred_check
      _
    $region15: #{tpu_custom_call.1} parent=1 // pred_check_branch
      %34 = sbr.rel (0) target = $region17
    $region16: #{tpu_custom_call.1} parent=1 // pred_region
      %35 = dma.done [#allocation3], 128
    $region17: #{tpu_custom_call.1} parent=1 // pred_fallthru
      _
    // Predicated region
    $region18: #{tpu_custom_call.1} parent=1 // pred_check
      _
    $region19: #{tpu_custom_call.1} parent=1 // pred_check_branch
      %37 = sbr.rel (0) target = $region21
    $region20: #{tpu_custom_call.1} parent=1 // pred_region
      %38 = dma.done [#allocation6], 128
    $region21: #{tpu_custom_call.1} parent=1 // pred_fallthru
      _
    %v39 = vld [vmem:[#allocation2] sm:$0xff]
    %v40 = vld [vmem:[#allocation5] sm:$0xff]
    %v41 = vld [vmem:[%s2] sm:$0x1]
    %v42 = vsub.f32 0.0, %v39
    %v43 = vmax.f32 %v42, 0.0
    %v44 = vand.u32 2147483647, %v39
    %v45 = vsub.f32 0.0, %v44
    %v46 = vmul.f32 %v45, 1.442695
    %v47 = vpow.pop %v46
    %v48 = vadd.f32 %v47, 1.0
    %v49 = vlog2.pop %v48
    %v50 = vmul.f32 %v49, 0.6931472
    %v51 = vmul.f32 -0.5, %v47
    %v52 = vadd.f32 %v51, 1.0
    %v53 = vmul.f32 %v52, %v47
    %v54 = vand.u32 2147483647, %v47
    %vm55 = vcmp.lt.f32.partialorder %v54, 0.0004427343
    %v56 = vsel %vm55, %v53, %v50
    %v57 = vadd.f32 %v43, %v56
    %v58 = vsub.f32 1.0, %v40
    %v59 = vmul.f32 %v58, %v39
    %v61 = vlaneseq
    %v62 = vshrl.u32 %v61, 7
    %v63 = vsub.s32 0, %v62
    %v64 = vrot.slane %v41, %v63
    %v66 = vmul.f32 %v64, %v40
    %v67 = vadd.f32 %v66, 1.0
    %v68 = vmul.f32 %v67, %v57
    %v69 = vadd.f32 %v59, %v68
    %v70 = vadd.f32 %v69, 0.0
    %71 = vst [vmem:[#allocation7] sm:$0xff] %v70
    // Predicated region
    $region22: #{tpu_custom_call.1} parent=1 // pred_check
      _
    $region23: #{tpu_custom_call.1} parent=1 // pred_check_branch
      %73 = sbr.rel (0) target = $region25
    $region24: #{tpu_custom_call.1} parent=1 // pred_region
      %s75 = ssub.s32 128, 128
      %76 = vsyncadd [#allocation4], %s75
      %s78 = sshll.u32 [#allocation7], 4
      %s79 = int_to_ptr.vmem [resolvable:$true] %s78
      %81 = dma.vmem_to_hbm [thread:$0]  %s79, 128, %s3, [#allocation4]
    $region25: #{tpu_custom_call.1} parent=1 // pred_fallthru
      _
    // Predicated region
    $region26: #{tpu_custom_call.1} parent=1 // pred_check
      _
    $region27: #{tpu_custom_call.1} parent=1 // pred_check_branch
      %83 = sbr.rel (0) target = $region29
    $region28: #{tpu_custom_call.1} parent=1 // pred_region
      %84 = dma.done [#allocation4], 128
    $region29: #{tpu_custom_call.1} parent=1 // pred_fallthru
      _
    %85 = vsyncpa [#allocation3], 1
    %86 = vsyncpa [#allocation6], 1
    %87 = vsyncpa [#allocation4], 1

</llo_original>
